<compile_context>
chip_gen: v5e
topology: v5e:2x2
jax: 0.10.0
libtpu: 0.0.40
codegen_flags: <defaults>
</compile_context>

<pallas_src>
import jax
import jax.numpy as jnp
from jax.experimental import pallas as pl
from jax.experimental.pallas import tpu as pltpu


def _bn_kernel(x_ref, beta_ref, o_ref):
    # Grid: (channel_tiles, batch). Batch is the fastest-varying axis; x's block
    # index does not depend on it, so the input tile is DMA'd only once per
    # channel tile.
    b = pl.program_id(1)

    @pl.when(b == 0)
    def _():
        x = x_ref[...].astype(jnp.float32)          # (TC, HW)
        n = x.shape[-1]
        mean = jnp.mean(x, axis=-1, keepdims=True)
        d = x - mean
        # torch.var default is unbiased (divides by N-1); guard N == 1.
        denom = float(max(n - 1, 1))
        var = jnp.sum(d * d, axis=-1, keepdims=True) / denom
        inv = jax.lax.rsqrt(var + 1e-5)
        o_ref[...] = (d * inv + beta_ref[...]).astype(o_ref.dtype)

    @pl.when(b != 0)
    def _():
        # The PyTorch loop only writes xx[0][i]; other batch entries stay zero.
        o_ref[...] = jnp.zeros_like(o_ref)


def _pick_channel_tile(C, HW, itemsize, target_bytes=2 << 20):
    """Largest channel tile with one (TC, HW) slab <= ~2 MiB.

    Double-buffered input + output blocks then total ~8 MiB, comfortably under
    the 16 MiB (v5e) / 32 MiB (v6e, v7x) default scoped-VMEM limits.
    TC is either the full C or a multiple of 8 sublanes.
    """
    if C * HW * itemsize <= target_bytes:
        return C
    tc = target_bytes // (HW * itemsize)
    tc = max(8, (tc // 8) * 8)
    return min(tc, C)


def channel_normalization_bn(x, gamma, beta):
    """Pallas TPU forward of ChannelNormalization (mode='BN').

    x: (B, C, H, W). gamma is unused in BN mode (kept for signature parity).
    Returns (B, C, H, W): batch 0 normalized per channel (+ beta), batches > 0 zero.
    """
    del gamma  # not used in mode='BN'
    B, C, H, W = x.shape
    HW = H * W

    # Free, contiguous reshape — no extra HBM traffic.
    x3 = x.reshape(B, C, HW)
    beta2 = beta.reshape(C, 1).astype(jnp.float32)

    tc = _pick_channel_tile(C, HW, jnp.dtype(x.dtype).itemsize)
    n_c_tiles = pl.cdiv(C, tc)

    out3 = pl.pallas_call(
        _bn_kernel,
        out_shape=jax.ShapeDtypeStruct((B, C, HW), x.dtype),
        grid=(n_c_tiles, B),
        in_specs=[
            # x: always read batch 0; block index is batch-invariant so the tile
            # is fetched once per channel tile, not re-fetched for b > 0.
            pl.BlockSpec((None, tc, HW), lambda i, b: (0, i, 0)),
            # beta follows the channel tiling.
            pl.BlockSpec((tc, 1), lambda i, b: (i, 0)),
        ],
        out_specs=pl.BlockSpec((None, tc, HW), lambda i, b: (b, i, 0)),
        compiler_params=pltpu.CompilerParams(
            # Channel tiles are independent -> "parallel" (megacore sharding on
            # v7x). Batch stays sequential within a tile so the x-block reuse holds.
            dimension_semantics=("parallel", "arbitrary"),
        ),
    )(x3, beta2)

    # TODO(synk): if H*W ever grows beyond the VMEM tile budget, add a reduction
    # grid axis over HW with sum / sum-of-squares scratch (two-pass stats).
    return out3.reshape(B, C, H, W)


def _reference_bn(x, beta):
    x0 = x[0]  # (C, H, W)
    C = x0.shape[0]
    flat = x0.reshape(C, -1)
    mean = flat.mean(axis=-1, keepdims=True)
    d = flat - mean
    var = (d * d).sum(axis=-1, keepdims=True) / (flat.shape[-1] - 1)
    out0 = d / jnp.sqrt(var + 1e-5) + beta.reshape(C, 1)
    out = jnp.zeros_like(x)
    return out.at[0].set(out0.reshape(x0.shape))


if __name__ == "__main__":
    key = jax.random.PRNGKey(0)
    B, C, H, W = 2, 4, 16, 16
    x = jax.random.normal(key, (B, C, H, W), dtype=jnp.float32)

    # Parameters exactly as in the module's __init__ (deterministic):
    gamma = jnp.ones((C,), dtype=jnp.float32)   # unused in BN mode
    beta = jnp.zeros((C,), dtype=jnp.float32)

    out = channel_normalization_bn(x, gamma, beta)
    out = jax.block_until_ready(out)

    ref = _reference_bn(x, beta)
    assert jnp.allclose(out, ref, atol=1e-5, rtol=1e-5), "mismatch vs reference"

    print("KERNEL_OK")
</pallas_src>

<mosaic_0001>
module attributes {stable_mosaic.version = 11 : i64} {
  func.func @_bn_kernel(%arg0: i32, %arg1: i32, %arg2: memref<1x4x256xf32, #tpu.memory_space<vmem>>, %arg3: memref<4x1xf32, #tpu.memory_space<vmem>>, %arg4: memref<1x4x256xf32, #tpu.memory_space<vmem>>) attributes {dimension_semantics = [#tpu.dimension_semantics<parallel>, #tpu.dimension_semantics<arbitrary>], iteration_bounds = array<i64: 1, 2>, scalar_prefetch = 0 : i64, scratch_operands = 0 : i64, tpu.core_type = #tpu.core_type<tc>, window_params = [{transform_indices = @transform_0, window_bounds = array<i64: 1, 4, 256>}, {transform_indices = @transform_1, window_bounds = array<i64: 4, 1>}, {transform_indices = @transform_2, window_bounds = array<i64: 1, 4, 256>}]} {
    %c0_i32 = arith.constant 0 : i32
    %0 = arith.cmpi eq, %arg1, %c0_i32 : i32
    %1 = arith.extui %0 : i1 to i32
    %c0_i32_0 = arith.constant 0 : i32
    %2 = arith.cmpi ne, %1, %c0_i32_0 : i32
    scf.if %2 {
      %c0 = arith.constant 0 : index
      %c0_3 = arith.constant 0 : index
      %c0_4 = arith.constant 0 : index
      %6 = vector.load %arg2[%c0, %c0_3, %c0_4] : memref<1x4x256xf32, #tpu.memory_space<vmem>>, vector<1x4x256xf32>
      %7 = vector.shape_cast %6 : vector<1x4x256xf32> to vector<4x256xf32>
      %cst = arith.constant dense<0.000000e+00> : vector<4xf32>
      %8 = vector.multi_reduction <add>, %7, %cst [1] : vector<4x256xf32> to vector<4xf32>
      %9 = vector.shape_cast %8 : vector<4xf32> to vector<4x1xf32>
      %cst_5 = arith.constant 2.560000e+02 : f32
      %10 = vector.broadcast %cst_5 : f32 to vector<4x1xf32>
      %11 = arith.divf %9, %10 : vector<4x1xf32>
      %12 = vector.broadcast %11 : vector<4x1xf32> to vector<4x256xf32>
      %13 = arith.subf %7, %12 : vector<4x256xf32>
      %14 = arith.mulf %13, %13 : vector<4x256xf32>
      %cst_6 = arith.constant dense<0.000000e+00> : vector<4xf32>
      %15 = vector.multi_reduction <add>, %14, %cst_6 [1] : vector<4x256xf32> to vector<4xf32>
      %16 = vector.shape_cast %15 : vector<4xf32> to vector<4x1xf32>
      %cst_7 = arith.constant 2.550000e+02 : f32
      %17 = vector.broadcast %cst_7 : f32 to vector<4x1xf32>
      %18 = arith.divf %16, %17 : vector<4x1xf32>
      %cst_8 = arith.constant 9.99999974E-6 : f32
      %19 = vector.broadcast %cst_8 : f32 to vector<4x1xf32>
      %20 = arith.addf %18, %19 : vector<4x1xf32>
      %21 = math.rsqrt %20 : vector<4x1xf32>
      %22 = vector.broadcast %21 : vector<4x1xf32> to vector<4x256xf32>
      %23 = arith.mulf %13, %22 : vector<4x256xf32>
      %c0_9 = arith.constant 0 : index
      %c0_10 = arith.constant 0 : index
      %24 = vector.load %arg3[%c0_9, %c0_10] : memref<4x1xf32, #tpu.memory_space<vmem>>, vector<4x1xf32>
      %25 = vector.broadcast %24 : vector<4x1xf32> to vector<4x256xf32>
      %26 = arith.addf %23, %25 : vector<4x256xf32>
      %c0_11 = arith.constant 0 : index
      %c0_12 = arith.constant 0 : index
      %c0_13 = arith.constant 0 : index
      %27 = vector.load %arg4[%c0_11, %c0_12, %c0_13] : memref<1x4x256xf32, #tpu.memory_space<vmem>>, vector<1x4x256xf32>
      %28 = vector.shape_cast %27 : vector<1x4x256xf32> to vector<4x256xf32>
      %29 = vector.shape_cast %26 : vector<4x256xf32> to vector<1x4x256xf32>
      tpu.vector_store %arg4[%c0_11, %c0_12, %c0_13], %29 {strides = array<i32>} : memref<1x4x256xf32, #tpu.memory_space<vmem>>, vector<1x4x256xf32>,
    } else {
    }
    %c0_i32_1 = arith.constant 0 : i32
    %3 = arith.cmpi ne, %arg1, %c0_i32_1 : i32
    %4 = arith.extui %3 : i1 to i32
    %c0_i32_2 = arith.constant 0 : i32
    %5 = arith.cmpi ne, %4, %c0_i32_2 : i32
    scf.if %5 {
      %cst = arith.constant 0.000000e+00 : f32
      %6 = vector.broadcast %cst : f32 to vector<4x256xf32>
      %c0 = arith.constant 0 : index
      %c0_3 = arith.constant 0 : index
      %c0_4 = arith.constant 0 : index
      %7 = vector.load %arg4[%c0, %c0_3, %c0_4] : memref<1x4x256xf32, #tpu.memory_space<vmem>>, vector<1x4x256xf32>
      %8 = vector.shape_cast %7 : vector<1x4x256xf32> to vector<4x256xf32>
      %9 = vector.shape_cast %6 : vector<4x256xf32> to vector<1x4x256xf32>
      tpu.vector_store %arg4[%c0, %c0_3, %c0_4], %9 {strides = array<i32>} : memref<1x4x256xf32, #tpu.memory_space<vmem>>, vector<1x4x256xf32>,
    } else {
    }
    return
  }
  func.func @transform_0(%arg0: i32, %arg1: i32) -> (i32, i32, i32) {
    %c0_i32 = arith.constant 0 : i32
    %c0_i32_0 = arith.constant 0 : i32
    %c0_i32_1 = arith.constant 0 : i32
    return %c0_i32, %arg0, %c0_i32_0 : i32, i32, i32
  }
  func.func @transform_1(%arg0: i32, %arg1: i32) -> (i32, i32) {
    %c0_i32 = arith.constant 0 : i32
    %c0_i32_0 = arith.constant 0 : i32
    return %arg0, %c0_i32 : i32, i32
  }
  func.func @transform_2(%arg0: i32, %arg1: i32) -> (i32, i32, i32) {
    %c0_i32 = arith.constant 0 : i32
    %c0_i32_0 = arith.constant 0 : i32
    return %arg1, %arg0, %c0_i32 : i32, i32, i32
  }
}

</mosaic_0001>

<llo_original>
// kernel: tpu_custom_call.1
$region0: #{tpu_custom_call.1}
  #allocation0 [shape = 'u32[]', space=smem, size = 0x4, offset = 0x4, fixed_abs, tag = 'smem constant byte address 0x4 - core index']
  #allocation1 [shape = 'u32[72,128]{1,0:T(1,128)}', space=vmem, size = 0x9000, scoped, tag = 'internal scratch']
  %s0 = inlined_call_operand.hbm [shape: f32[2,4,256], index: 0, kind: input, shape index: {}]
  %s1 = inlined_call_operand.vmem [shape: f32[4,1], index: 1, kind: input, shape index: {}]
  %s2 = inlined_call_operand.hbm [shape: f32[2,4,256], index: 2, kind: output, shape index: {}]
  %s3 = sld [smem:[#allocation0]]
  $region53: #{tpu_custom_call.1} parent=0
    _
  %s5 = ssub.s32 1, %s3
  %s6 = scalar_select 0, %s5, %s3
  $region1: #{tpu_custom_call.1} parent=0
    #allocation2 [shape = 'u8[4096]{0}', space=vmem, size = 0x1000, scoped, tag = 'input window, operand 0, single buffered']
    #allocation3 [shape = 's32[2]{0}', space=sflag, size = 0x8, scoped, tag = 'scoped memory for tpu_custom_call.1']
    #allocation4 [shape = 's32[2]{0}', space=sflag, size = 0x8, scoped, tag = 'scoped memory for tpu_custom_call.1']
    #allocation5 [shape = 'u8[8192]{0}', space=vmem, size = 0x2000, scoped, tag = 'output window, operand 0']
    %7 = vsyncpa [#allocation3], 0
    %8 = vsyncpa [#allocation4], 0
    %s9 = scalar_lea.sflag [#allocation4], 1
    %10 = vsyncpa %s9, 0
    loop: start=0, step=1, limit=4
    $region2: #{tpu_custom_call.1} parent=1 // loop_pre_header
      _
    $region3: #{tpu_custom_call.1} parent=1 // loop_header
      %s12 = sphi 0, %s16
      %p13 = scmp.ge.s32.totalorder %s12, 4
      %s19 = sphi 0, %s31
      %s20 = sphi 0, %s27
      %s21 = sphi 0, %s19
      %s22 = sphi 0, %s20
      %s23 = sphi 0, %s21
      %s24 = sphi 0, %s22
      %s34 = sphi 0, %s36
      %s37 = sphi 0, %s34
      %s38 = sphi 0, %s37
      %s54 = sphi 0, %s38
      %s60 = sphi 0, %s62
      %s63 = sphi 0, %s60
      %s64 = sphi 0, %s63
      %s80 = sphi 0, %s64
      %s88 = sphi 0, %s90
      %s91 = sphi 0, %s88
      %s92 = sphi 0, %s91
      %s108 = sphi 0, %s92
    $region4: #{tpu_custom_call.1} parent=1 // loop_header_branch
      %15 = sbr.rel (%p13) target = $region8
    $region5: #{tpu_custom_call.1} parent=1 // loop_body
      %s17 = ssub.s32 %s12, 1
      %s18 = ssub.s32 %s12, 2
      %s25 = sadd.s32 1, %s20
      %p26 = scmp.ge.s32.totalorder %s25, 2
      %s27 = scalar_select %p26, 0, %s25
      %s28 = sadd.s32 1, %s19
      %s29 = scalar_select %p26, %s28, %s19
      %p30 = scmp.ge.s32.totalorder %s29, 1
      %s31 = scalar_select %p30, 0, %s29
      %s32 = ssub.s32 %s19, %s31
      %p33 = scmp.eq.s32.totalorder %s32, 0
      %s35 = sadd.s32 %s34, 1
      %s36 = scalar_select %p33, %s34, %s35
      %p39 = pneg %p33
      %p40 = scmp.eq.s32.totalorder %s12, 1
      %p41 = por %p39, %p40
      %p42 = scmp.ne.s32.totalorder %s34, %s37
      %p43 = scmp.eq.s32.totalorder %s12, 0
      %p44 = por %p42, %p43
      %p45 = scmp.ne.s32.totalorder %s34, %s37
      %p46 = scmp.eq.s32.totalorder %s17, 1
      %p47 = por %p45, %p46
      %p48 = scmp.ne.s32.totalorder %s37, %s38
      %p49 = scmp.eq.s32.totalorder %s17, 0
      %p50 = por %p48, %p49
      %p51 = scmp.ne.s32.totalorder %s37, %s38
      %p52 = scmp.eq.s32.totalorder %s18, 1
      %p53 = por %p51, %p52
      %p55 = scmp.ne.s32.totalorder %s38, %s54
      %p56 = scmp.eq.s32.totalorder %s18, 0
      %p57 = por %p55, %p56
      %s58 = ssub.s32 %s19, %s31
      %p59 = scmp.eq.s32.totalorder %s58, 0
      %s61 = sadd.s32 %s60, 1
      %s62 = scalar_select %p59, %s60, %s61
      %p65 = pneg %p59
      %p66 = scmp.eq.s32.totalorder %s12, 1
      %p67 = por %p65, %p66
      %p68 = scmp.ne.s32.totalorder %s60, %s63
      %p69 = scmp.eq.s32.totalorder %s12, 0
      %p70 = por %p68, %p69
      %p71 = scmp.ne.s32.totalorder %s60, %s63
      %p72 = scmp.eq.s32.totalorder %s17, 1
      %p73 = por %p71, %p72
      %p74 = scmp.ne.s32.totalorder %s63, %s64
      %p75 = scmp.eq.s32.totalorder %s17, 0
      %p76 = por %p74, %p75
      %p77 = scmp.ne.s32.totalorder %s63, %s64
      %p78 = scmp.eq.s32.totalorder %s18, 1
      %p79 = por %p77, %p78
      %p81 = scmp.ne.s32.totalorder %s64, %s80
      %p82 = scmp.eq.s32.totalorder %s18, 0
      %p83 = por %p81, %p82
      %s84 = ssub.s32 %s20, %s27
      %s85 = ssub.s32 %s19, %s31
      %s86 = sor.u32 %s84, %s85
      %p87 = scmp.eq.s32.totalorder %s86, 0
      %s89 = sadd.s32 %s88, 1
      %s90 = scalar_select %p87, %s88, %s89
      %p93 = pneg %p87
      %p94 = scmp.eq.s32.totalorder %s12, 1
      %p95 = por %p93, %p94
      %p96 = scmp.ne.s32.totalorder %s88, %s91
      %p97 = scmp.eq.s32.totalorder %s12, 0
      %p98 = por %p96, %p97
      %p99 = scmp.ne.s32.totalorder %s88, %s91
      %p100 = scmp.eq.s32.totalorder %s17, 1
      %p101 = por %p99, %p100
      %p102 = scmp.ne.s32.totalorder %s91, %s92
      %p103 = scmp.eq.s32.totalorder %s17, 0
      %p104 = por %p102, %p103
      %p105 = scmp.ne.s32.totalorder %s91, %s92
      %p106 = scmp.eq.s32.totalorder %s18, 1
      %p107 = por %p105, %p106
      %p109 = scmp.ne.s32.totalorder %s92, %s108
      %p110 = scmp.eq.s32.totalorder %s18, 0
      %p111 = por %p109, %p110
      %p112 = scmp.le.s32.totalorder 1, %s12
      %p113 = scmp.lt.s32.totalorder %s12, 3
      %p114 = pnand %p112, %p113
      %p115 = pneg %p114
      // Predicated region
      $region9: #{tpu_custom_call.1} parent=5 // pred_check
        _
      $region10: #{tpu_custom_call.1} parent=5 // pred_check_branch
        %117 = sbr.rel (%p114) target = $region12
      $region11: #{tpu_custom_call.1} parent=5 // pred_region
        %s118 = ssub.s32 %s12, 1
        // Predicated region
        $region13: #{tpu_custom_call.1} parent=11 // pred_check
          %p119 = pneg %p50
        $region14: #{tpu_custom_call.1} parent=11 // pred_check_branch
          %121 = sbr.rel (%p119) target = $region16
        $region15: #{tpu_custom_call.1} parent=11 // pred_region
          %123 = vsyncadd [#allocation3], 0
          %s124 = smul.addr %s21, 2
          %s125 = smul.addr %s124, 4
          %s126 = scalar_lea.hbm %s0, %s125
          %s128 = sshll.u32 %s126, 4
          %s129 = int_to_ptr.hbm [resolvable:$true] %s128
          %s130 = sshll.u32 [#allocation2], 4
          %s131 = int_to_ptr.vmem [resolvable:$true] %s130
          %133 = dma.hbm_to_vmem [thread:$0]  %s129, 128, %s131, [#allocation3]
        $region16: #{tpu_custom_call.1} parent=11 // pred_fallthru
          _
        // Predicated region
        $region17: #{tpu_custom_call.1} parent=11 // pred_check
          %p134 = pneg %p76
        $region18: #{tpu_custom_call.1} parent=11 // pred_check_branch
          %136 = sbr.rel (%p134) target = $region20
        $region19: #{tpu_custom_call.1} parent=11 // pred_region
          %p137 = scmp.lt.s32.totalorder %s21, 0
          %s138 = scalar_select %p137, %s21, 0
          %s139 = smul.addr %s138, 4
          %s140 = scalar_lea.vmem %s1, %s139
        $region20: #{tpu_custom_call.1} parent=11 // pred_fallthru
          _
      $region12: #{tpu_custom_call.1} parent=5 // pred_fallthru
        _
      %p141 = scmp.lt.s32.totalorder %s12, 2
      // Predicated region
      $region21: #{tpu_custom_call.1} parent=5 // pred_check
        %p142 = pneg %p141
      $region22: #{tpu_custom_call.1} parent=5 // pred_check_branch
        %144 = sbr.rel (%p142) target = $region24
      $region23: #{tpu_custom_call.1} parent=5 // pred_region
        _
      $region24: #{tpu_custom_call.1} parent=5 // pred_fallthru
        _
      %p145 = scmp.le.s32.totalorder 1, %s12
      %p146 = scmp.lt.s32.totalorder %s12, 3
      %p147 = pnand %p145, %p146
      %p148 = pneg %p147
      // Predicated region
      $region25: #{tpu_custom_call.1} parent=5 // pred_check
        _
      $region26: #{tpu_custom_call.1} parent=5 // pred_check_branch
        %150 = sbr.rel (%p147) target = $region28
      $region27: #{tpu_custom_call.1} parent=5 // pred_region
        %s151 = ssub.s32 %s12, 1
        // Predicated region
        $region29: #{tpu_custom_call.1} parent=27 // pred_check
          %p152 = pneg %p50
        $region30: #{tpu_custom_call.1} parent=27 // pred_check_branch
          %154 = sbr.rel (%p152) target = $region32
        $region31: #{tpu_custom_call.1} parent=27 // pred_region
          %156 = dma.done [#allocation3], 128
        $region32: #{tpu_custom_call.1} parent=27 // pred_fallthru
          _
        %p157 = pneg %p50
        %p158 = pneg %p47
        %p159 = scmp.lt.s32.totalorder %s21, 0
        %s160 = scalar_select %p159, %s21, 0
        %s161 = smul.addr %s160, 4
        %s162 = scalar_lea.vmem %s1, %s161
        %p163 = pneg %p76
        %p164 = pneg %p73
        %p165 = pneg %p104
        %p166 = pneg %p101
        %s167 = sand.u32 %s91, 1
        %s168 = scalar_lea.sflag [#allocation4], %s167
        %s169 = sand.u32 %s91, 1
        %s170 = smul.addr %s169, 8
        %s171 = scalar_lea.vmem [#allocation5], %s170
        %p172 = scmp.lt.s32.totalorder %s21, 0
        %s173 = scalar_select %p172, %s21, 0
        %s174 = smul.addr %s173, 4
        %s175 = scalar_lea.vmem %s1, %s174
        %p176 = scmp.eq.s32.totalorder %s22, 0
        // Predicated region
        $region33: #{tpu_custom_call.1} parent=27 // pred_check
          %p177 = pneg %p176
        $region34: #{tpu_custom_call.1} parent=27 // pred_check_branch
          %179 = sbr.rel (%p177) target = $region36
        $region35: #{tpu_custom_call.1} parent=27 // pred_region
          %v180 = vld [vmem:[#allocation2] sm:$0xff]
          %182 = vst [vmem:[#allocation1] ss:$2 sm:$0xff] %v180
          %v183 = vld.sshfl [vmem:[#allocation1] sm:$0xff pattern:$0x75316420]
          %v184 = vld.sshfl [vmem:[#allocation1 + $0x8] sm:$0xff pattern:$0x75316420]
          %vm187 = vcmask 1043456
          %v188 = vsel %vm187, %v183, 0.0
          %v189 = vsel %vm187, %v184, 0.0
          %v190 = vadd.f32 %v188, %v189
          %191 = vadd.xlane.f32.xlu0 %v190
          %v192 = vpop.xlane.xlu0 %191
          %v193 = vrcp.pop 256.0
          %v194 = vmul.f32 256.0, %v193
          %v195 = vsub.f32 1.0, %v194
          %v196 = vmul.f32 %v193, %v195
          %v197 = vadd.f32 %v193, %v196
          %vm198 = vweird.f32 %v193
          %v199 = vsel %vm198, %v193, %v197
          %v200 = vmul.f32 %v192, %v199
          %v203 = vunpack.c.l.s4 839922192
          %v204 = vunpack.c.0.s8 %v203
          %v205 = vperm.slane %v200, %v204
          %v207 = vsub.f32 %v180, %v205
          %v208 = vmul.f32 %v207, %v207
          %210 = vst [vmem:[#allocation1] ss:$2 sm:$0xff] %v208
          %v211 = vld.sshfl [vmem:[#allocation1] sm:$0xff pattern:$0x75316420]
          %v212 = vld.sshfl [vmem:[#allocation1 + $0x8] sm:$0xff pattern:$0x75316420]
          %v215 = vsel %vm187, %v211, 0.0
          %v216 = vsel %vm187, %v212, 0.0
          %v217 = vadd.f32 %v215, %v216
          %218 = vadd.xlane.f32.xlu0 %v217
          %v219 = vpop.xlane.xlu0 %218
          %v220 = vrcp.pop 255.0
          %v221 = vmul.f32 255.0, %v220
          %v222 = vsub.f32 1.0, %v221
          %v223 = vmul.f32 %v220, %v222
          %v224 = vadd.f32 %v220, %v223
          %vm225 = vweird.f32 %v220
          %v226 = vsel %vm225, %v220, %v224
          %v227 = vmul.f32 %v219, %v226
          %v228 = vadd.f32 %v227, 1e-05
          %v229 = vrsqrt.pop %v228
          %v230 = vmul.f32 %v229, %v228
          %v231 = vmul.f32 %v230, %v229
          %v232 = vmul.f32 0.5, %v231
          %v233 = vsub.f32 1.5, %v232
          %v234 = vmul.f32 %v229, %v233
          %vm235 = vweird.f32 %v228
          %vm236 = vweird.f32 %v229
          %vm237 = vmor %vm235, %vm236
          %v238 = vsel %vm237, %v229, %v234
          %v241 = vunpack.c.l.s4 839922192
          %v242 = vunpack.c.0.s8 %v241
          %v243 = vperm.slane %v238, %v242
          %v245 = vmul.f32 %v207, %v243
          %v246 = vld [vmem:[%s175] sm:$0xf]
          %248 = vset.pattern.permute.xlu0 0
          %249 = vperm.xlu0 %248, %v246
          %v250 = vpop.permute.xlu0 %249
          %v252 = vunpack.c.l.s4 839922192
          %v253 = vunpack.c.0.s8 %v252
          %v254 = vperm.slane %v250, %v253
          %v256 = vadd.f32 %v245, %v254
          %257 = vst [vmem:[%s171] sm:$0xff] %v256
        $region36: #{tpu_custom_call.1} parent=27 // pred_fallthru
          _
        %p258 = scmp.ne.s32.totalorder %s22, 0
        // Predicated region
        $region37: #{tpu_custom_call.1} parent=27 // pred_check
          %p259 = pneg %p258
        $region38: #{tpu_custom_call.1} parent=27 // pred_check_branch
          %261 = sbr.rel (%p259) target = $region40
        $region39: #{tpu_custom_call.1} parent=27 // pred_region
          %262 = vst [vmem:[%s171] sm:$0xff] 0.0
        $region40: #{tpu_custom_call.1} parent=27 // pred_fallthru
          _
        %s263 = sand.u32 %s91, 1
        %s264 = scalar_lea.sflag [#allocation4], %s263
        %s265 = sand.u32 %s91, 1
        %s266 = smul.addr %s265, 8
        %s267 = scalar_lea.vmem [#allocation5], %s266
        // Predicated region
        $region41: #{tpu_custom_call.1} parent=27 // pred_check
          %p268 = pneg %p101
        $region42: #{tpu_custom_call.1} parent=27 // pred_check_branch
          %270 = sbr.rel (%p268) target = $region44
        $region43: #{tpu_custom_call.1} parent=27 // pred_region
          %272 = vsyncadd %s264, 0
          %s273 = smul.addr %s21, 2
          %s274 = smul.addr %s22, 2
          %s275 = sadd.s32 %s273, %s274
          %s276 = smul.addr %s275, 4
          %s277 = scalar_lea.hbm %s2, %s276
          %s279 = sshll.u32 %s267, 4
          %s280 = int_to_ptr.vmem [resolvable:$true] %s279
          %s281 = sshll.u32 %s277, 4
          %s282 = int_to_ptr.hbm [resolvable:$true] %s281
          %284 = dma.vmem_to_hbm [thread:$0]  %s280, 128, %s282, %s264
        $region44: #{tpu_custom_call.1} parent=27 // pred_fallthru
          _
      $region28: #{tpu_custom_call.1} parent=5 // pred_fallthru
        _
      %p285 = scmp.le.s32.totalorder 2, %s12
      // Predicated region
      $region45: #{tpu_custom_call.1} parent=5 // pred_check
        %p286 = pneg %p285
      $region46: #{tpu_custom_call.1} parent=5 // pred_check_branch
        %288 = sbr.rel (%p286) target = $region48
      $region47: #{tpu_custom_call.1} parent=5 // pred_region
        %s289 = ssub.s32 %s12, 2
        // Predicated region
        $region49: #{tpu_custom_call.1} parent=47 // pred_check
          %p290 = pneg %p107
        $region50: #{tpu_custom_call.1} parent=47 // pred_check_branch
          %292 = sbr.rel (%p290) target = $region52
        $region51: #{tpu_custom_call.1} parent=47 // pred_region
          %s293 = sand.u32 %s92, 1
          %s294 = scalar_lea.sflag [#allocation4], %s293
          %s295 = sand.u32 %s92, 1
          %s296 = smul.addr %s295, 8
          %s297 = scalar_lea.vmem [#allocation5], %s296
          %299 = dma.done %s294, 128
        $region52: #{tpu_custom_call.1} parent=47 // pred_fallthru
          _
      $region48: #{tpu_custom_call.1} parent=5 // pred_fallthru
        _
    $region6: #{tpu_custom_call.1} parent=1 // loop_footer
      %s16 = sadd.s32 1, %s12
    $region7: #{tpu_custom_call.1} parent=1 // loop_footer_branch
      %11 = sbr.rel target = $region3
    $region8: #{tpu_custom_call.1} parent=1 // loop_exit
      _
    %300 = vsyncpa [#allocation3], 1
    %s301 = scalar_lea.sflag [#allocation3], 1
    %302 = vsyncpa %s301, 1
    %303 = vsyncpa [#allocation4], 1
    %s304 = scalar_lea.sflag [#allocation4], 1
    %305 = vsyncpa %s304, 1

</llo_original>
